<compile_context>
chip_gen: v6e
topology: v6e:2x2x1
jax: 0.10.0
libtpu: 0.0.40
codegen_flags: <defaults>
</compile_context>

<pallas_src>
import functools

import jax
import jax.numpy as jnp
from jax.experimental import pallas as pl
from jax.experimental.pallas import tpu as pltpu

STATE_DIM = 32          # fc1 input (the module's `state_dim`)
ACTION_DIM = 3
ATOMS = 8
H1 = 800                # fc1 output (padded to 896 inside prepare_params)
H2 = 128                # fc2 output


# ----------------------------------------------------------------------------
# Fused Pallas kernel: fc1 -> relu -> fc2 -> relu -> fc3 -> per-action softmax
# ----------------------------------------------------------------------------
def _actor_fused_kernel(x_ref, w1_ref, b1_ref, w2_ref, b2_ref, w3_ref, b3_ref,
                        o_ref):
    # fc1 (bf16 MXU, f32 accumulate) + bias + relu in f32
    x = x_ref[...].astype(jnp.bfloat16)                        # (bb, state_dim)
    h = jnp.dot(x, w1_ref[...], preferred_element_type=jnp.float32)
    h = jnp.maximum(h + b1_ref[...], 0.0)                      # (bb, 896) f32

    # fc2
    h = jnp.dot(h.astype(jnp.bfloat16), w2_ref[...],
                preferred_element_type=jnp.float32)
    h = jnp.maximum(h + b2_ref[...], 0.0)                      # (bb, 128) f32

    # fc3 -> logits
    logits = jnp.dot(h.astype(jnp.bfloat16), w3_ref[...],
                     preferred_element_type=jnp.float32)
    logits = logits + b3_ref[...]                              # (bb, A*atoms)

    # Stable softmax over each action's 8-atom group, assembled into one
    # full-width value so the output path is a single lane-dense store.
    parts = []
    for a in range(ACTION_DIM):
        z = logits[:, a * ATOMS:(a + 1) * ATOMS]               # (bb, atoms)
        z = z - jnp.max(z, axis=-1, keepdims=True)
        e = jnp.exp(z)
        inv = pl.reciprocal(jnp.sum(e, axis=-1, keepdims=True), approx=True)
        parts.append(e * inv)
    o_ref[...] = jnp.concatenate(parts, axis=-1).astype(o_ref.dtype)


# ----------------------------------------------------------------------------
# One-time parameter preparation (outside the per-step call)
# ----------------------------------------------------------------------------
def prepare_params(params):
    """Cast weights to bf16 and zero-pad H1 to a 128-aligned width."""
    h1 = params["fc1_w"].shape[1]
    h1_pad = ((h1 + 127) // 128) * 128
    pad = h1_pad - h1
    return {
        "fc1_w": jnp.pad(params["fc1_w"], ((0, 0), (0, pad))).astype(jnp.bfloat16),
        "fc1_b": jnp.pad(params["fc1_b"], (0, pad)).astype(jnp.float32).reshape(1, -1),
        "fc2_w": jnp.pad(params["fc2_w"], ((0, pad), (0, 0))).astype(jnp.bfloat16),
        "fc2_b": params["fc2_b"].astype(jnp.float32).reshape(1, -1),
        "fc3_w": params["fc3_w"].astype(jnp.bfloat16),
        "fc3_b": params["fc3_b"].astype(jnp.float32).reshape(1, -1),
    }


def _pick_batch_tile(b):
    """Whole batch when tiny; ~half-batch (multiple of 8) so dual-TC chips
    (v7x) get >=2 'parallel' grid steps; capped at 512 rows for large B."""
    if b <= 16:
        return b
    half = (b + 1) // 2
    return min(512, ((half + 7) // 8) * 8)


# ----------------------------------------------------------------------------
# Wrapper
# ----------------------------------------------------------------------------
@functools.partial(jax.jit, static_argnames=())
def actor_forward(x, prep):
    b, state_dim = x.shape
    h1p = prep["fc1_w"].shape[1]
    h2 = prep["fc2_w"].shape[1]
    n_out = prep["fc3_w"].shape[1]                  # ACTION_DIM * ATOMS

    bb = _pick_batch_tile(b)
    grid = (pl.cdiv(b, bb),)

    def full_spec(shape):
        return pl.BlockSpec(shape, lambda i: (0, 0))

    cost = pl.CostEstimate(
        flops=2 * b * (state_dim * h1p + h1p * h2 + h2 * n_out),
        transcendentals=b * n_out,
        bytes_accessed=(4 * x.size
                        + 2 * (prep["fc1_w"].size + prep["fc2_w"].size
                               + prep["fc3_w"].size)
                        + 4 * (h1p + h2 + n_out)
                        + 4 * b * n_out),
    )

    out2d = pl.pallas_call(
        _actor_fused_kernel,
        out_shape=jax.ShapeDtypeStruct((b, n_out), jnp.float32),
        grid=grid,
        in_specs=[
            pl.BlockSpec((bb, state_dim), lambda i: (i, 0)),   # x
            full_spec((state_dim, h1p)),                       # fc1_w (bf16)
            full_spec((1, h1p)),                               # fc1_b
            full_spec((h1p, h2)),                              # fc2_w (bf16)
            full_spec((1, h2)),                                # fc2_b
            full_spec((h2, n_out)),                            # fc3_w (bf16)
            full_spec((1, n_out)),                             # fc3_b
        ],
        out_specs=pl.BlockSpec((bb, n_out), lambda i: (i, 0)),
        compiler_params=pltpu.CompilerParams(
            dimension_semantics=("parallel",)),
        cost_estimate=cost,
    )(x,
      prep["fc1_w"], prep["fc1_b"],
      prep["fc2_w"], prep["fc2_b"],
      prep["fc3_w"], prep["fc3_b"])

    # Free (contiguous) reshape to the C51 output layout.
    return out2d.reshape(b, ACTION_DIM, ATOMS)


# ----------------------------------------------------------------------------
# References (correctness checks)
# ----------------------------------------------------------------------------
def reference_forward_f32(x, params):
    """Pure f32 reference on the original (unpadded) params."""
    h = jnp.maximum(x @ params["fc1_w"] + params["fc1_b"], 0.0)
    h = jnp.maximum(h @ params["fc2_w"] + params["fc2_b"], 0.0)
    logits = h @ params["fc3_w"] + params["fc3_b"]
    p = jax.nn.softmax(logits.reshape(-1, ATOMS), axis=-1)
    return p.reshape(-1, ACTION_DIM, ATOMS)


def reference_forward_bf16(x, prep):
    """Reference mirroring the kernel's bf16-matmul / f32-softmax numerics."""
    h = jnp.dot(x.astype(jnp.bfloat16), prep["fc1_w"],
                preferred_element_type=jnp.float32) + prep["fc1_b"]
    h = jnp.maximum(h, 0.0)
    h = jnp.dot(h.astype(jnp.bfloat16), prep["fc2_w"],
                preferred_element_type=jnp.float32) + prep["fc2_b"]
    h = jnp.maximum(h, 0.0)
    logits = jnp.dot(h.astype(jnp.bfloat16), prep["fc3_w"],
                     preferred_element_type=jnp.float32) + prep["fc3_b"]
    p = jax.nn.softmax(logits.reshape(-1, ATOMS), axis=-1)
    return p.reshape(-1, ACTION_DIM, ATOMS)


# ----------------------------------------------------------------------------
# Deterministic parameter construction
# ----------------------------------------------------------------------------
def make_params(key):
    ks = jax.random.split(key, 6)
    scale = 0.05
    return {
        "fc1_w": scale * jax.random.normal(ks[0], (STATE_DIM, H1), jnp.float32),
        "fc1_b": scale * jax.random.normal(ks[1], (H1,), jnp.float32),
        "fc2_w": scale * jax.random.normal(ks[2], (H1, H2), jnp.float32),
        "fc2_b": scale * jax.random.normal(ks[3], (H2,), jnp.float32),
        "fc3_w": scale * jax.random.normal(ks[4], (H2, ACTION_DIM * ATOMS), jnp.float32),
        "fc3_b": scale * jax.random.normal(ks[5], (ACTION_DIM * ATOMS,), jnp.float32),
    }


if __name__ == "__main__":
    key = jax.random.PRNGKey(0)
    k_x, k_p = jax.random.split(key)

    x = jax.random.normal(k_x, (2, STATE_DIM), jnp.float32)    # (B, state_dim)
    params = make_params(k_p)
    prep = prepare_params(params)                              # one-time prep

    out = actor_forward(x, prep)
    out = jax.block_until_ready(out)

    ref_bf16 = reference_forward_bf16(x, prep)
    ref_f32 = reference_forward_f32(x, params)

    assert out.shape == (2, ACTION_DIM, ATOMS), out.shape
    # Tight check against a numerically matched (bf16-matmul) reference.
    assert jnp.allclose(out, ref_bf16, atol=5e-3, rtol=5e-3), \
        float(jnp.max(jnp.abs(out - ref_bf16)))
    # Loose check against the original full-f32 semantics.
    assert jnp.allclose(out, ref_f32, atol=5e-2, rtol=5e-2), \
        float(jnp.max(jnp.abs(out - ref_f32)))
    # Softmax rows sum to ~1 (approx reciprocal allows a small tolerance).
    assert jnp.allclose(out.sum(-1), 1.0, atol=5e-3)

    print("KERNEL_OK")
</pallas_src>

<mosaic_0001>
module attributes {stable_mosaic.version = 11 : i64} {
  func.func @_actor_fused_kernel(%arg0: i32, %arg1: memref<2x32xf32, #tpu.memory_space<vmem>>, %arg2: memref<32x896xbf16, #tpu.memory_space<vmem>>, %arg3: memref<1x896xf32, #tpu.memory_space<vmem>>, %arg4: memref<896x128xbf16, #tpu.memory_space<vmem>>, %arg5: memref<1x128xf32, #tpu.memory_space<vmem>>, %arg6: memref<128x24xbf16, #tpu.memory_space<vmem>>, %arg7: memref<1x24xf32, #tpu.memory_space<vmem>>, %arg8: memref<2x24xf32, #tpu.memory_space<vmem>>) attributes {dimension_semantics = [#tpu.dimension_semantics<parallel>], iteration_bounds = array<i64: 1>, scalar_prefetch = 0 : i64, scratch_operands = 0 : i64, tpu.core_type = #tpu.core_type<tc>, window_params = [{transform_indices = @transform_0, window_bounds = array<i64: 2, 32>}, {pipeline_mode = #tpu.pipeline_mode<synchronous>, transform_indices = @transform_1, window_bounds = array<i64: 32, 896>}, {pipeline_mode = #tpu.pipeline_mode<synchronous>, transform_indices = @transform_2, window_bounds = array<i64: 1, 896>}, {pipeline_mode = #tpu.pipeline_mode<synchronous>, transform_indices = @transform_3, window_bounds = array<i64: 896, 128>}, {pipeline_mode = #tpu.pipeline_mode<synchronous>, transform_indices = @transform_4, window_bounds = array<i64: 1, 128>}, {pipeline_mode = #tpu.pipeline_mode<synchronous>, transform_indices = @transform_5, window_bounds = array<i64: 128, 24>}, {pipeline_mode = #tpu.pipeline_mode<synchronous>, transform_indices = @transform_6, window_bounds = array<i64: 1, 24>}, {transform_indices = @transform_7, window_bounds = array<i64: 2, 24>}]} {
    %c0 = arith.constant 0 : index
    %c0_0 = arith.constant 0 : index
    %0 = vector.load %arg1[%c0, %c0_0] : memref<2x32xf32, #tpu.memory_space<vmem>>, vector<2x32xf32>
    %1 = arith.truncf %0 : vector<2x32xf32> to vector<2x32xbf16>
    %c0_1 = arith.constant 0 : index
    %c0_2 = arith.constant 0 : index
    %2 = vector.load %arg2[%c0_1, %c0_2] : memref<32x896xbf16, #tpu.memory_space<vmem>>, vector<32x896xbf16>
    %cst = arith.constant dense<0.000000e+00> : vector<2x896xf32>
    %3 = tpu.matmul %1, %2, %cst {dimension_numbers = #tpu.dot_dimension_numbers<[1], [0], [0], [1], [0, 0, 1, 1], [], []>} : vector<2x32xbf16>, vector<32x896xbf16>, vector<2x896xf32> -> vector<2x896xf32>
    %c0_3 = arith.constant 0 : index
    %c0_4 = arith.constant 0 : index
    %4 = vector.load %arg3[%c0_3, %c0_4] : memref<1x896xf32, #tpu.memory_space<vmem>>, vector<1x896xf32>
    %5 = vector.broadcast %4 : vector<1x896xf32> to vector<2x896xf32>
    %6 = arith.addf %3, %5 : vector<2x896xf32>
    %cst_5 = arith.constant 0.000000e+00 : f32
    %7 = vector.broadcast %cst_5 : f32 to vector<2x896xf32>
    %8 = arith.maximumf %6, %7 : vector<2x896xf32>
    %9 = arith.truncf %8 : vector<2x896xf32> to vector<2x896xbf16>
    %c0_6 = arith.constant 0 : index
    %c0_7 = arith.constant 0 : index
    %10 = vector.load %arg4[%c0_6, %c0_7] : memref<896x128xbf16, #tpu.memory_space<vmem>>, vector<896x128xbf16>
    %cst_8 = arith.constant dense<0.000000e+00> : vector<2x128xf32>
    %11 = tpu.matmul %9, %10, %cst_8 {dimension_numbers = #tpu.dot_dimension_numbers<[1], [0], [0], [1], [0, 0, 1, 1], [], []>} : vector<2x896xbf16>, vector<896x128xbf16>, vector<2x128xf32> -> vector<2x128xf32>
    %c0_9 = arith.constant 0 : index
    %c0_10 = arith.constant 0 : index
    %12 = vector.load %arg5[%c0_9, %c0_10] : memref<1x128xf32, #tpu.memory_space<vmem>>, vector<1x128xf32>
    %13 = vector.broadcast %12 : vector<1x128xf32> to vector<2x128xf32>
    %14 = arith.addf %11, %13 : vector<2x128xf32>
    %cst_11 = arith.constant 0.000000e+00 : f32
    %15 = vector.broadcast %cst_11 : f32 to vector<2x128xf32>
    %16 = arith.maximumf %14, %15 : vector<2x128xf32>
    %17 = arith.truncf %16 : vector<2x128xf32> to vector<2x128xbf16>
    %c0_12 = arith.constant 0 : index
    %c0_13 = arith.constant 0 : index
    %18 = vector.load %arg6[%c0_12, %c0_13] : memref<128x24xbf16, #tpu.memory_space<vmem>>, vector<128x24xbf16>
    %cst_14 = arith.constant dense<0.000000e+00> : vector<2x24xf32>
    %19 = tpu.matmul %17, %18, %cst_14 {dimension_numbers = #tpu.dot_dimension_numbers<[1], [0], [0], [1], [0, 0, 1, 1], [], []>} : vector<2x128xbf16>, vector<128x24xbf16>, vector<2x24xf32> -> vector<2x24xf32>
    %c0_15 = arith.constant 0 : index
    %c0_16 = arith.constant 0 : index
    %20 = vector.load %arg7[%c0_15, %c0_16] : memref<1x24xf32, #tpu.memory_space<vmem>>, vector<1x24xf32>
    %21 = vector.broadcast %20 : vector<1x24xf32> to vector<2x24xf32>
    %22 = arith.addf %19, %21 : vector<2x24xf32>
    %23 = vector.extract_strided_slice %22 {offsets = [0, 0], sizes = [2, 8], strides = [1, 1]} : vector<2x24xf32> to vector<2x8xf32>
    %cst_17 = arith.constant dense<0xFF800000> : vector<2xf32>
    %24 = vector.multi_reduction <maximumf>, %23, %cst_17 [1] : vector<2x8xf32> to vector<2xf32>
    %25 = vector.shape_cast %24 : vector<2xf32> to vector<2x1xf32>
    %26 = vector.broadcast %25 : vector<2x1xf32> to vector<2x8xf32>
    %27 = arith.subf %23, %26 : vector<2x8xf32>
    %28 = math.exp %27 : vector<2x8xf32>
    %cst_18 = arith.constant dense<0.000000e+00> : vector<2xf32>
    %29 = vector.multi_reduction <add>, %28, %cst_18 [1] : vector<2x8xf32> to vector<2xf32>
    %30 = vector.shape_cast %29 : vector<2xf32> to vector<2x1xf32>
    %31 = tpu.reciprocal %30 {approx = true} : vector<2x1xf32> -> vector<2x1xf32>
    %32 = vector.broadcast %31 : vector<2x1xf32> to vector<2x8xf32>
    %33 = arith.mulf %28, %32 : vector<2x8xf32>
    %34 = vector.extract_strided_slice %22 {offsets = [0, 8], sizes = [2, 8], strides = [1, 1]} : vector<2x24xf32> to vector<2x8xf32>
    %cst_19 = arith.constant dense<0xFF800000> : vector<2xf32>
    %35 = vector.multi_reduction <maximumf>, %34, %cst_19 [1] : vector<2x8xf32> to vector<2xf32>
    %36 = vector.shape_cast %35 : vector<2xf32> to vector<2x1xf32>
    %37 = vector.broadcast %36 : vector<2x1xf32> to vector<2x8xf32>
    %38 = arith.subf %34, %37 : vector<2x8xf32>
    %39 = math.exp %38 : vector<2x8xf32>
    %cst_20 = arith.constant dense<0.000000e+00> : vector<2xf32>
    %40 = vector.multi_reduction <add>, %39, %cst_20 [1] : vector<2x8xf32> to vector<2xf32>
    %41 = vector.shape_cast %40 : vector<2xf32> to vector<2x1xf32>
    %42 = tpu.reciprocal %41 {approx = true} : vector<2x1xf32> -> vector<2x1xf32>
    %43 = vector.broadcast %42 : vector<2x1xf32> to vector<2x8xf32>
    %44 = arith.mulf %39, %43 : vector<2x8xf32>
    %45 = vector.extract_strided_slice %22 {offsets = [0, 16], sizes = [2, 8], strides = [1, 1]} : vector<2x24xf32> to vector<2x8xf32>
    %cst_21 = arith.constant dense<0xFF800000> : vector<2xf32>
    %46 = vector.multi_reduction <maximumf>, %45, %cst_21 [1] : vector<2x8xf32> to vector<2xf32>
    %47 = vector.shape_cast %46 : vector<2xf32> to vector<2x1xf32>
    %48 = vector.broadcast %47 : vector<2x1xf32> to vector<2x8xf32>
    %49 = arith.subf %45, %48 : vector<2x8xf32>
    %50 = math.exp %49 : vector<2x8xf32>
    %cst_22 = arith.constant dense<0.000000e+00> : vector<2xf32>
    %51 = vector.multi_reduction <add>, %50, %cst_22 [1] : vector<2x8xf32> to vector<2xf32>
    %52 = vector.shape_cast %51 : vector<2xf32> to vector<2x1xf32>
    %53 = tpu.reciprocal %52 {approx = true} : vector<2x1xf32> -> vector<2x1xf32>
    %54 = vector.broadcast %53 : vector<2x1xf32> to vector<2x8xf32>
    %55 = arith.mulf %50, %54 : vector<2x8xf32>
    %56 = tpu.concatenate %33, %44, %55 in 1 : vector<2x8xf32>, vector<2x8xf32>, vector<2x8xf32> -> vector<2x24xf32>
    %c0_23 = arith.constant 0 : index
    %c0_24 = arith.constant 0 : index
    %57 = vector.load %arg8[%c0_23, %c0_24] : memref<2x24xf32, #tpu.memory_space<vmem>>, vector<2x24xf32>
    tpu.vector_store %arg8[%c0_23, %c0_24], %56 {strides = array<i32>} : memref<2x24xf32, #tpu.memory_space<vmem>>, vector<2x24xf32>,
    return
  }
  func.func @transform_0(%arg0: i32) -> (i32, i32) {
    %c0_i32 = arith.constant 0 : i32
    %c0_i32_0 = arith.constant 0 : i32
    return %arg0, %c0_i32 : i32, i32
  }
  func.func @transform_1(%arg0: i32) -> (i32, i32) {
    %c0_i32 = arith.constant 0 : i32
    %c0_i32_0 = arith.constant 0 : i32
    %c0_i32_1 = arith.constant 0 : i32
    return %c0_i32, %c0_i32_0 : i32, i32
  }
  func.func @transform_2(%arg0: i32) -> (i32, i32) {
    %c0_i32 = arith.constant 0 : i32
    %c0_i32_0 = arith.constant 0 : i32
    %c0_i32_1 = arith.constant 0 : i32
    return %c0_i32, %c0_i32_0 : i32, i32
  }
  func.func @transform_3(%arg0: i32) -> (i32, i32) {
    %c0_i32 = arith.constant 0 : i32
    %c0_i32_0 = arith.constant 0 : i32
    %c0_i32_1 = arith.constant 0 : i32
    return %c0_i32, %c0_i32_0 : i32, i32
  }
  func.func @transform_4(%arg0: i32) -> (i32, i32) {
    %c0_i32 = arith.constant 0 : i32
    %c0_i32_0 = arith.constant 0 : i32
    %c0_i32_1 = arith.constant 0 : i32
    return %c0_i32, %c0_i32_0 : i32, i32
  }
  func.func @transform_5(%arg0: i32) -> (i32, i32) {
    %c0_i32 = arith.constant 0 : i32
    %c0_i32_0 = arith.constant 0 : i32
    %c0_i32_1 = arith.constant 0 : i32
    return %c0_i32, %c0_i32_0 : i32, i32
  }
  func.func @transform_6(%arg0: i32) -> (i32, i32) {
    %c0_i32 = arith.constant 0 : i32
    %c0_i32_0 = arith.constant 0 : i32
    %c0_i32_1 = arith.constant 0 : i32
    return %c0_i32, %c0_i32_0 : i32, i32
  }
  func.func @transform_7(%arg0: i32) -> (i32, i32) {
    %c0_i32 = arith.constant 0 : i32
    %c0_i32_0 = arith.constant 0 : i32
    return %arg0, %c0_i32 : i32, i32
  }
}

</mosaic_0001>

<llo_original>
// kernel: actor_forward.1
$region0: #{actor_forward.1}
  #allocation0 [shape = 'u32[]', space=smem, size = 0x4, offset = 0x4, fixed_abs, tag = 'smem constant byte address 0x4 - core index']
  #allocation1 [shape = 'u32[144,128]{1,0:T(1,128)}', space=vmem, size = 0x12000, scoped, tag = 'internal scratch']
  %s0 = inlined_call_operand.vmem [shape: f32[2,32], index: 0, kind: input, shape index: {}]
  %s1 = inlined_call_operand.hbm [shape: bf16[32,896], index: 1, kind: input, shape index: {}]
  %s2 = inlined_call_operand.vmem [shape: f32[1,896], index: 2, kind: input, shape index: {}]
  %s3 = inlined_call_operand.hbm [shape: bf16[896,128], index: 3, kind: input, shape index: {}]
  %s4 = inlined_call_operand.vmem [shape: f32[1,128], index: 4, kind: input, shape index: {}]
  %s5 = inlined_call_operand.vmem [shape: bf16[128,24], index: 5, kind: input, shape index: {}]
  %s6 = inlined_call_operand.vmem [shape: f32[1,24], index: 6, kind: input, shape index: {}]
  %s7 = inlined_call_operand.vmem [shape: f32[2,24], index: 7, kind: output, shape index: {}]
  %s8 = sld [smem:[#allocation0]]
  $region46: #{actor_forward.1} parent=0
    _
  %s10 = ssub.s32 1, %s8
  %s11 = scalar_select 0, %s10, %s8
  $region1: #{actor_forward.1} parent=0
    #allocation2 [shape = 'u8[57344]{0}', space=vmem, size = 0xe000, scoped, tag = 'input window, operand 1, single buffered']
    #allocation3 [shape = 's32[1]{0}', space=sflag, size = 0x4, scoped, tag = 'scoped memory for actor_forward.1']
    #allocation4 [shape = 'u8[229376]{0}', space=vmem, size = 0x38000, scoped, tag = 'input window, operand 3, single buffered']
    #allocation5 [shape = 's32[1]{0}', space=sflag, size = 0x4, scoped, tag = 'scoped memory for actor_forward.1']
    %12 = vsyncpa [#allocation3], 0
    %13 = vsyncpa [#allocation5], 0
    // Predicated region
    $region2: #{actor_forward.1} parent=1 // pred_check
      _
    $region3: #{actor_forward.1} parent=1 // pred_check_branch
      %15 = sbr.rel (0) target = $region5
    $region4: #{actor_forward.1} parent=1 // pred_region
      _
    $region5: #{actor_forward.1} parent=1 // pred_fallthru
      _
    // Predicated region
    $region6: #{actor_forward.1} parent=1 // pred_check
      _
    $region7: #{actor_forward.1} parent=1 // pred_check_branch
      %17 = sbr.rel (0) target = $region9
    $region8: #{actor_forward.1} parent=1 // pred_region
      %s19 = ssub.s32 1792, 1792
      %20 = vsyncadd [#allocation3], %s19
      %s21 = sshll.u32 [#allocation2], 4
      %s22 = int_to_ptr.vmem [resolvable:$true] %s21
      %27 = dma.hbm_to_vmem [thread:$0]  %s1, 1792, %s22, [#allocation3], 448, 448, 28
    $region9: #{actor_forward.1} parent=1 // pred_fallthru
      _
    // Predicated region
    $region10: #{actor_forward.1} parent=1 // pred_check
      _
    $region11: #{actor_forward.1} parent=1 // pred_check_branch
      %29 = sbr.rel (0) target = $region13
    $region12: #{actor_forward.1} parent=1 // pred_region
      _
    $region13: #{actor_forward.1} parent=1 // pred_fallthru
      _
    // Predicated region
    $region14: #{actor_forward.1} parent=1 // pred_check
      _
    $region15: #{actor_forward.1} parent=1 // pred_check_branch
      %31 = sbr.rel (0) target = $region17
    $region16: #{actor_forward.1} parent=1 // pred_region
      %s33 = ssub.s32 7168, 7168
      %34 = vsyncadd [#allocation5], %s33
      %s35 = sshll.u32 [#allocation4], 4
      %s36 = int_to_ptr.vmem [resolvable:$true] %s35
      %41 = dma.hbm_to_vmem [thread:$0]  %s3, 7168, %s36, [#allocation5], 64, 64, 4
    $region17: #{actor_forward.1} parent=1 // pred_fallthru
      _
    // Predicated region
    $region18: #{actor_forward.1} parent=1 // pred_check
      _
    $region19: #{actor_forward.1} parent=1 // pred_check_branch
      %43 = sbr.rel (0) target = $region21
    $region20: #{actor_forward.1} parent=1 // pred_region
      _
    $region21: #{actor_forward.1} parent=1 // pred_fallthru
      _
    // Predicated region
    $region22: #{actor_forward.1} parent=1 // pred_check
      _
    $region23: #{actor_forward.1} parent=1 // pred_check_branch
      %45 = sbr.rel (0) target = $region25
    $region24: #{actor_forward.1} parent=1 // pred_region
      _
    $region25: #{actor_forward.1} parent=1 // pred_fallthru
      _
    // Predicated region
    $region26: #{actor_forward.1} parent=1 // pred_check
      _
    $region27: #{actor_forward.1} parent=1 // pred_check_branch
      %47 = sbr.rel (0) target = $region29
    $region28: #{actor_forward.1} parent=1 // pred_region
      _
    $region29: #{actor_forward.1} parent=1 // pred_fallthru
      _
    // Predicated region
    $region30: #{actor_forward.1} parent=1 // pred_check
      _
    $region31: #{actor_forward.1} parent=1 // pred_check_branch
      %49 = sbr.rel (0) target = $region33
    $region32: #{actor_forward.1} parent=1 // pred_region
      %50 = dma.done [#allocation3], 1792
    $region33: #{actor_forward.1} parent=1 // pred_fallthru
      _
    // Predicated region
    $region34: #{actor_forward.1} parent=1 // pred_check
      _
    $region35: #{actor_forward.1} parent=1 // pred_check_branch
      %52 = sbr.rel (0) target = $region37
    $region36: #{actor_forward.1} parent=1 // pred_region
      %53 = dma.done [#allocation5], 7168
    $region37: #{actor_forward.1} parent=1 // pred_fallthru
      _
    %v55 = vld [vmem:[%s0] sm:$0x3]
    %v56 = vpack.c.bf16 %v55, %v55
    %v57 = vld [vmem:[#allocation2] sm:$0xff]
    %v58 = vld [vmem:[#allocation2 + $0x8] sm:$0xff]
    %v59 = vld [vmem:[#allocation2 + $0x10] sm:$0xff]
    %v60 = vld [vmem:[#allocation2 + $0x18] sm:$0xf]
    %v61 = vld [vmem:[#allocation2 + $0x1c] sm:$0xff]
    %v62 = vld [vmem:[#allocation2 + $0x24] sm:$0xff]
    %v63 = vld [vmem:[#allocation2 + $0x2c] sm:$0xff]
    %v64 = vld [vmem:[#allocation2 + $0x34] sm:$0xf]
    %v65 = vld [vmem:[#allocation2 + $0x38] sm:$0xff]
    %v66 = vld [vmem:[#allocation2 + $0x40] sm:$0xff]
    %v67 = vld [vmem:[#allocation2 + $0x48] sm:$0xff]
    %v68 = vld [vmem:[#allocation2 + $0x50] sm:$0xf]
    %v69 = vld [vmem:[#allocation2 + $0x54] sm:$0xff]
    %v70 = vld [vmem:[#allocation2 + $0x5c] sm:$0xff]
    %v71 = vld [vmem:[#allocation2 + $0x64] sm:$0xff]
    %v72 = vld [vmem:[#allocation2 + $0x6c] sm:$0xf]
    %v73 = vld [vmem:[%s2] sm:$0xff]
    %v75 = vlaneseq
    %v76 = vshrl.u32 %v75, 7
    %v77 = vsub.s32 0, %v76
    %v78 = vrot.slane %v73, %v77
    %v79 = vlaneseq
    %v80 = vshrl.u32 %v79, 7
    %v81 = vsub.s32 1, %v80
    %v82 = vrot.slane %v73, %v81
    %v83 = vlaneseq
    %v84 = vshrl.u32 %v83, 7
    %v85 = vsub.s32 2, %v84
    %v86 = vrot.slane %v73, %v85
    %v87 = vlaneseq
    %v88 = vshrl.u32 %v87, 7
    %v89 = vsub.s32 3, %v88
    %v90 = vrot.slane %v73, %v89
    %v91 = vlaneseq
    %v92 = vshrl.u32 %v91, 7
    %v93 = vsub.s32 4, %v92
    %v94 = vrot.slane %v73, %v93
    %v95 = vlaneseq
    %v96 = vshrl.u32 %v95, 7
    %v97 = vsub.s32 5, %v96
    %v98 = vrot.slane %v73, %v97
    %v99 = vlaneseq
    %v100 = vshrl.u32 %v99, 7
    %v101 = vsub.s32 6, %v100
    %v102 = vrot.slane %v73, %v101
    %v126 = vunpack.c.l.b16 %v57
    %v127 = vunpack.c.h.b16 %v57
    %v128 = vunpack.c.l.b16 %v58
    %v129 = vunpack.c.h.b16 %v58
    %v130 = vunpack.c.l.b16 %v59
    %v131 = vunpack.c.h.b16 %v59
    %v132 = vunpack.c.l.b16 %v60
    %v133 = vunpack.c.l.b16 %v61
    %v134 = vunpack.c.h.b16 %v61
    %v135 = vunpack.c.l.b16 %v62
    %v136 = vunpack.c.h.b16 %v62
    %v137 = vunpack.c.l.b16 %v63
    %v138 = vunpack.c.h.b16 %v63
    %v139 = vunpack.c.l.b16 %v64
    %v140 = vunpack.c.l.b16 %v65
    %v141 = vunpack.c.h.b16 %v65
    %v142 = vunpack.c.l.b16 %v66
    %v143 = vunpack.c.h.b16 %v66
    %v144 = vunpack.c.l.b16 %v67
    %v145 = vunpack.c.h.b16 %v67
    %v146 = vunpack.c.l.b16 %v68
    %v147 = vunpack.c.l.b16 %v69
    %v148 = vunpack.c.h.b16 %v69
    %v149 = vunpack.c.l.b16 %v70
    %v150 = vunpack.c.h.b16 %v70
    %v151 = vunpack.c.l.b16 %v71
    %v152 = vunpack.c.h.b16 %v71
    %v153 = vunpack.c.l.b16 %v72
    %v154 = vpack.c.b16 %v133, %v126
    %v155 = vpack.c.b16 %v134, %v127
    %v156 = vpack.c.b16 %v135, %v128
    %v157 = vpack.c.b16 %v136, %v129
    %v158 = vpack.c.b16 %v137, %v130
    %v159 = vpack.c.b16 %v138, %v131
    %v160 = vpack.c.b16 %v139, %v132
    %v161 = vpack.c.b16 %v147, %v140
    %v162 = vpack.c.b16 %v148, %v141
    %v163 = vpack.c.b16 %v149, %v142
    %v164 = vpack.c.b16 %v150, %v143
    %v165 = vpack.c.b16 %v151, %v144
    %v166 = vpack.c.b16 %v152, %v145
    %v167 = vpack.c.b16 %v153, %v146
    %vm182 = vcmask 261120
    %v184 = vsel %vm182, %v56, 0
    %186 = vmatprep.subr.bf16.mxu0 0
    %187 = vmatpush1.bf16.msra.mxu0 0
    %188 = vmatprep.subr.bf16.mxu0 0
    %189 = vmatpush1.bf16.msra.mxu0 0
    %190 = vmatprep.subr.bf16.mxu0 0
    %191 = vmatpush1.bf16.msra.mxu0 0
    %192 = vmatprep.subr.bf16.mxu0 0
    %193 = vmatpush1.bf16.msra.mxu0 0
    %194 = vmatprep.subr.bf16.mxu0 0
    %195 = vmatpush1.bf16.msra.mxu0 0
    %196 = vmatprep.subr.bf16.mxu0 0
    %197 = vmatpush1.bf16.msra.mxu0 0
    %198 = vmatprep.subr.bf16.mxu0 %v162
    %199 = vmatpush1.bf16.msra.mxu0 %v161
    %200 = vmatprep.subr.bf16.mxu0 %v155
    %201 = vmatpush1.bf16.msra.mxu0 %v154
    %202 = vmatprep.subr.bf16.mxu0 0
    %203 = vmatpush2.bf16.msra.mxu0 0
    %204 = vmatprep.subr.bf16.mxu0 0
    %205 = vmatpush2.bf16.msra.mxu0 0
    %206 = vmatprep.subr.bf16.mxu0 0
    %207 = vmatpush2.bf16.msra.mxu0 0
    %208 = vmatprep.subr.bf16.mxu0 0
    %209 = vmatpush2.bf16.msra.mxu0 0
    %210 = vmatprep.subr.bf16.mxu0 0
    %211 = vmatpush2.bf16.msra.mxu0 0
    %212 = vmatprep.subr.bf16.mxu0 0
    %213 = vmatpush2.bf16.msra.mxu0 0
    %214 = vmatprep.subr.bf16.mxu0 0
    %215 = vmatpush2.bf16.msra.mxu0 0
    %216 = vmatprep.subr.bf16.mxu0 0
    %217 = vmatpush2.bf16.msra.mxu0 0
    %218 = vmatprep.mubr.bf16.mxu0 0
    %219 = vmatmul.mubr.bf16.gmra.mxu0 %v184
    %v220 = vpop.f32.mrf.mxu0
    %v221 = vadd.f32 %v78, %v220
    %v222 = vpop.f32.mrf.mxu0
    %v223 = vadd.f32 %v82, %v222
    %v224 = vpop.f32.mrf.mxu0
    %v225 = vpop.f32.mrf.mxu0
    %226 = vdwg.mxu0
    %227 = vmatprep.subr.bf16.mxu0 0
    %228 = vmatpush1.bf16.msra.mxu0 0
    %229 = vmatprep.subr.bf16.mxu0 0
    %230 = vmatpush1.bf16.msra.mxu0 0
    %231 = vmatprep.subr.bf16.mxu0 0
    %232 = vmatpush1.bf16.msra.mxu0 0
    %233 = vmatprep.subr.bf16.mxu0 0
    %234 = vmatpush1.bf16.msra.mxu0 0
    %235 = vmatprep.subr.bf16.mxu0 0
    %236 = vmatpush1.bf16.msra.mxu0 0
    %237 = vmatprep.subr.bf16.mxu0 0
    %238 = vmatpush1.bf16.msra.mxu0 0
    %239 = vmatprep.subr.bf16.mxu0 %v164
    %240 = vmatpush1.bf16.msra.mxu0 %v163
    %241 = vmatprep.subr.bf16.mxu0 %v157
    %242 = vmatpush1.bf16.msra.mxu0 %v156
    %243 = vmatprep.subr.bf16.mxu0 0
    %244 = vmatpush2.bf16.msra.mxu0 0
    %245 = vmatprep.subr.bf16.mxu0 0
    %246 = vmatpush2.bf16.msra.mxu0 0
    %247 = vmatprep.subr.bf16.mxu0 0
    %248 = vmatpush2.bf16.msra.mxu0 0
    %249 = vmatprep.subr.bf16.mxu0 0
    %250 = vmatpush2.bf16.msra.mxu0 0
    %251 = vmatprep.subr.bf16.mxu0 0
    %252 = vmatpush2.bf16.msra.mxu0 0
    %253 = vmatprep.subr.bf16.mxu0 0
    %254 = vmatpush2.bf16.msra.mxu0 0
    %255 = vmatprep.subr.bf16.mxu0 0
    %256 = vmatpush2.bf16.msra.mxu0 0
    %257 = vmatprep.subr.bf16.mxu0 0
    %258 = vmatpush2.bf16.msra.mxu0 0
    %259 = vmatprep.mubr.bf16.mxu0 0
    %260 = vmatmul.mubr.bf16.gmra.mxu0 %v184
    %v261 = vpop.f32.mrf.mxu0
    %v262 = vadd.f32 %v86, %v261
    %v263 = vpop.f32.mrf.mxu0
    %v264 = vadd.f32 %v90, %v263
    %v265 = vpop.f32.mrf.mxu0
    %v266 = vpop.f32.mrf.mxu0
    %267 = vdwg.mxu0
    %268 = vmatprep.subr.bf16.mxu0 0
    %269 = vmatpush1.bf16.msra.mxu0 0
    %270 = vmatprep.subr.bf16.mxu0 0
    %271 = vmatpush1.bf16.msra.mxu0 0
    %272 = vmatprep.subr.bf16.mxu0 0
    %273 = vmatpush1.bf16.msra.mxu0 0
    %274 = vmatprep.subr.bf16.mxu0 0
    %275 = vmatpush1.bf16.msra.mxu0 0
    %276 = vmatprep.subr.bf16.mxu0 0
    %277 = vmatpush1.bf16.msra.mxu0 0
    %278 = vmatprep.subr.bf16.mxu0 0
    %279 = vmatpush1.bf16.msra.mxu0 0
    %280 = vmatprep.subr.bf16.mxu0 %v166
    %281 = vmatpush1.bf16.msra.mxu0 %v165
    %282 = vmatprep.subr.bf16.mxu0 %v159
    %283 = vmatpush1.bf16.msra.mxu0 %v158
    %284 = vmatprep.subr.bf16.mxu0 0
    %285 = vmatpush2.bf16.msra.mxu0 0
    %286 = vmatprep.subr.bf16.mxu0 0
    %287 = vmatpush2.bf16.msra.mxu0 0
    %288 = vmatprep.subr.bf16.mxu0 0
    %289 = vmatpush2.bf16.msra.mxu0 0
    %290 = vmatprep.subr.bf16.mxu0 0
    %291 = vmatpush2.bf16.msra.mxu0 0
    %292 = vmatprep.subr.bf16.mxu0 0
    %293 = vmatpush2.bf16.msra.mxu0 0
    %294 = vmatprep.subr.bf16.mxu0 0
    %295 = vmatpush2.bf16.msra.mxu0 0
    %296 = vmatprep.subr.bf16.mxu0 0
    %297 = vmatpush2.bf16.msra.mxu0 0
    %298 = vmatprep.subr.bf16.mxu0 0
    %299 = vmatpush2.bf16.msra.mxu0 0
    %300 = vmatprep.mubr.bf16.mxu0 0
    %301 = vmatmul.mubr.bf16.gmra.mxu0 %v184
    %v302 = vpop.f32.mrf.mxu0
    %v303 = vadd.f32 %v94, %v302
    %v304 = vpop.f32.mrf.mxu0
    %v305 = vadd.f32 %v98, %v304
    %v306 = vpop.f32.mrf.mxu0
    %v307 = vpop.f32.mrf.mxu0
    %308 = vdwg.mxu0
    %309 = vmatprep.subr.bf16.mxu0 0
    %310 = vmatpush1.bf16.msra.mxu0 0
    %311 = vmatprep.subr.bf16.mxu0 0
    %312 = vmatpush1.bf16.msra.mxu0 0
    %313 = vmatprep.subr.bf16.mxu0 0
    %314 = vmatpush1.bf16.msra.mxu0 0
    %315 = vmatprep.subr.bf16.mxu0 0
    %316 = vmatpush1.bf16.msra.mxu0 0
    %317 = vmatprep.subr.bf16.mxu0 0
    %318 = vmatpush1.bf16.msra.mxu0 0
    %319 = vmatprep.subr.bf16.mxu0 0
    %320 = vmatpush1.bf16.msra.mxu0 0
    %321 = vmatprep.subr.bf16.mxu0 0
    %322 = vmatpush1.bf16.msra.mxu0 %v167
    %323 = vmatprep.subr.bf16.mxu0 0
    %324 = vmatpush1.bf16.msra.mxu0 %v160
    %325 = vmatprep.subr.bf16.mxu0 0
    %326 = vmatpush2.bf16.msra.mxu0 0
    %327 = vmatprep.subr.bf16.mxu0 0
    %328 = vmatpush2.bf16.msra.mxu0 0
    %329 = vmatprep.subr.bf16.mxu0 0
    %330 = vmatpush2.bf16.msra.mxu0 0
    %331 = vmatprep.subr.bf16.mxu0 0
    %332 = vmatpush2.bf16.msra.mxu0 0
    %333 = vmatprep.subr.bf16.mxu0 0
    %334 = vmatpush2.bf16.msra.mxu0 0
    %335 = vmatprep.subr.bf16.mxu0 0
    %336 = vmatpush2.bf16.msra.mxu0 0
    %337 = vmatprep.subr.bf16.mxu0 0
    %338 = vmatpush2.bf16.msra.mxu0 0
    %339 = vmatprep.subr.bf16.mxu0 0
    %340 = vmatpush2.bf16.msra.mxu0 0
    %341 = vmatprep.mubr.bf16.mxu0 0
    %342 = vmatmul.mubr.bf16.gmra.mxu0 %v184
    %v343 = vpop.f32.mrf.mxu0
    %v344 = vadd.f32 %v102, %v343
    %v345 = vpop.f32.mrf.mxu0
    %v346 = vpop.f32.mrf.mxu0
    %v347 = vpop.f32.mrf.mxu0
    %348 = vdwg.mxu0
    %v349 = vmax.f32 %v221, 0.0
    %v350 = vmax.f32 %v223, 0.0
    %v351 = vmax.f32 %v262, 0.0
    %v352 = vmax.f32 %v264, 0.0
    %v353 = vmax.f32 %v303, 0.0
    %v354 = vmax.f32 %v305, 0.0
    %v355 = vmax.f32 %v344, 0.0
    %v356 = vpack.c.bf16 %v349, %v349
    %v357 = vpack.c.bf16 %v350, %v350
    %v358 = vpack.c.bf16 %v351, %v351
    %v359 = vpack.c.bf16 %v352, %v352
    %v360 = vpack.c.bf16 %v353, %v353
    %v361 = vpack.c.bf16 %v354, %v354
    %v362 = vpack.c.bf16 %v355, %v355
    %v363 = vld [vmem:[#allocation4] sm:$0xf]
    %v364 = vld [vmem:[#allocation4 + $0x4] sm:$0xf]
    %v365 = vld [vmem:[#allocation4 + $0x8] sm:$0xf]
    %v366 = vld [vmem:[#allocation4 + $0xc] sm:$0xf]
    %v367 = vld [vmem:[#allocation4 + $0x10] sm:$0xf]
    %v368 = vld [vmem:[#allocation4 + $0x14] sm:$0xf]
    %v369 = vld [vmem:[#allocation4 + $0x18] sm:$0xf]
    %v370 = vld [vmem:[#allocation4 + $0x1c] sm:$0xf]
    %v371 = vld [vmem:[#allocation4 + $0x20] sm:$0xf]
    %v372 = vld [vmem:[#allocation4 + $0x24] sm:$0xf]
    %v373 = vld [vmem:[#allocation4 + $0x28] sm:$0xf]
    %v374 = vld [vmem:[#allocation4 + $0x2c] sm:$0xf]
    %v375 = vld [vmem:[#allocation4 + $0x30] sm:$0xf]
    %v376 = vld [vmem:[#allocation4 + $0x34] sm:$0xf]
    %v377 = vld [vmem:[#allocation4 + $0x38] sm:$0xf]
    %v378 = vld [vmem:[#allocation4 + $0x3c] sm:$0xf]
    %v379 = vld [vmem:[#allocation4 + $0x40] sm:$0xf]
    %v380 = vld [vmem:[#allocation4 + $0x44] sm:$0xf]
    %v381 = vld [vmem:[#allocation4 + $0x48] sm:$0xf]
    %v382 = vld [vmem:[#allocation4 + $0x4c] sm:$0xf]
    %v383 = vld [vmem:[#allocation4 + $0x50] sm:$0xf]
    %v384 = vld [vmem:[#allocation4 + $0x54] sm:$0xf]
    %v385 = vld [vmem:[#allocation4 + $0x58] sm:$0xf]
    %v386 = vld [vmem:[#allocation4 + $0x5c] sm:$0xf]
    %v387 = vld [vmem:[#allocation4 + $0x60] sm:$0xf]
    %v388 = vld [vmem:[#allocation4 + $0x64] sm:$0xf]
    %v389 = vld [vmem:[#allocation4 + $0x68] sm:$0xf]
    %v390 = vld [vmem:[#allocation4 + $0x6c] sm:$0xf]
    %v391 = vld [vmem:[#allocation4 + $0x70] sm:$0xf]
    %v392 = vld [vmem:[#allocation4 + $0x74] sm:$0xf]
    %v393 = vld [vmem:[#allocation4 + $0x78] sm:$0xf]
    %v394 = vld [vmem:[#allocation4 + $0x7c] sm:$0xf]
    %v395 = vld [vmem:[#allocation4 + $0x80] sm:$0xf]
    %v396 = vld [vmem:[#allocation4 + $0x84] sm:$0xf]
    %v397 = vld [vmem:[#allocation4 + $0x88] sm:$0xf]
    %v398 = vld [vmem:[#allocation4 + $0x8c] sm:$0xf]
    %v399 = vld [vmem:[#allocation4 + $0x90] sm:$0xf]
    %v400 = vld [vmem:[#allocation4 + $0x94] sm:$0xf]
    %v401 = vld [vmem:[#allocation4 + $0x98] sm:$0xf]
    %v402 = vld [vmem:[#allocation4 + $0x9c] sm:$0xf]
    %v403 = vld [vmem:[#allocation4 + $0xa0] sm:$0xf]
    %v404 = vld [vmem:[#allocation4 + $0xa4] sm:$0xf]
    %v405 = vld [vmem:[#allocation4 + $0xa8] sm:$0xf]
    %v406 = vld [vmem:[#allocation4 + $0xac] sm:$0xf]
    %v407 = vld [vmem:[#allocation4 + $0xb0] sm:$0xf]
    %v408 = vld [vmem:[#allocation4 + $0xb4] sm:$0xf]
    %v409 = vld [vmem:[#allocation4 + $0xb8] sm:$0xf]
    %v410 = vld [vmem:[#allocation4 + $0xbc] sm:$0xf]
    %v411 = vld [vmem:[#allocation4 + $0xc0] sm:$0xf]
    %v412 = vld [vmem:[#allocation4 + $0xc4] sm:$0xf]
    %v413 = vld [vmem:[#allocation4 + $0xc8] sm:$0xf]
    %v414 = vld [vmem:[#allocation4 + $0xcc] sm:$0xf]
    %v415 = vld [vmem:[#allocation4 + $0xd0] sm:$0xf]
    %v416 = vld [vmem:[#allocation4 + $0xd4] sm:$0xf]
    %v417 = vld [vmem:[#allocation4 + $0xd8] sm:$0xf]
    %v418 = vld [vmem:[#allocation4 + $0xdc] sm:$0xf]
    %v419 = vld [vmem:[#allocation4 + $0xe0] sm:$0xf]
    %v420 = vld [vmem:[#allocation4 + $0xe4] sm:$0xf]
    %v421 = vld [vmem:[#allocation4 + $0xe8] sm:$0xf]
    %v422 = vld [vmem:[#allocation4 + $0xec] sm:$0xf]
    %v423 = vld [vmem:[#allocation4 + $0xf0] sm:$0xf]
    %v424 = vld [vmem:[#allocation4 + $0xf4] sm:$0xf]
    %v425 = vld [vmem:[#allocation4 + $0xf8] sm:$0xf]
    %v426 = vld [vmem:[#allocation4 + $0xfc] sm:$0xf]
    %v427 = vld [vmem:[#allocation4 + $0x100] sm:$0xf]
    %v428 = vld [vmem:[#allocation4 + $0x104] sm:$0xf]
    %v429 = vld [vmem:[#allocation4 + $0x108] sm:$0xf]
    %v430 = vld [vmem:[#allocation4 + $0x10c] sm:$0xf]
    %v431 = vld [vmem:[#allocation4 + $0x110] sm:$0xf]
    %v432 = vld [vmem:[#allocation4 + $0x114] sm:$0xf]
    %v433 = vld [vmem:[#allocation4 + $0x118] sm:$0xf]
    %v434 = vld [vmem:[#allocation4 + $0x11c] sm:$0xf]
    %v435 = vld [vmem:[#allocation4 + $0x120] sm:$0xf]
    %v436 = vld [vmem:[#allocation4 + $0x124] sm:$0xf]
    %v437 = vld [vmem:[#allocation4 + $0x128] sm:$0xf]
    %v438 = vld [vmem:[#allocation4 + $0x12c] sm:$0xf]
    %v439 = vld [vmem:[#allocation4 + $0x130] sm:$0xf]
    %v440 = vld [vmem:[#allocation4 + $0x134] sm:$0xf]
    %v441 = vld [vmem:[#allocation4 + $0x138] sm:$0xf]
    %v442 = vld [vmem:[#allocation4 + $0x13c] sm:$0xf]
    %v443 = vld [vmem:[#allocation4 + $0x140] sm:$0xf]
    %v444 = vld [vmem:[#allocation4 + $0x144] sm:$0xf]
    %v445 = vld [vmem:[#allocation4 + $0x148] sm:$0xf]
    %v446 = vld [vmem:[#allocation4 + $0x14c] sm:$0xf]
    %v447 = vld [vmem:[#allocation4 + $0x150] sm:$0xf]
    %v448 = vld [vmem:[#allocation4 + $0x154] sm:$0xf]
    %v449 = vld [vmem:[#allocation4 + $0x158] sm:$0xf]
    %v450 = vld [vmem:[#allocation4 + $0x15c] sm:$0xf]
    %v451 = vld [vmem:[#allocation4 + $0x160] sm:$0xf]
    %v452 = vld [vmem:[#allocation4 + $0x164] sm:$0xf]
    %v453 = vld [vmem:[#allocation4 + $0x168] sm:$0xf]
    %v454 = vld [vmem:[#allocation4 + $0x16c] sm:$0xf]
    %v455 = vld [vmem:[#allocation4 + $0x170] sm:$0xf]
    %v456 = vld [vmem:[#allocation4 + $0x174] sm:$0xf]
    %v457 = vld [vmem:[#allocation4 + $0x178] sm:$0xf]
    %v458 = vld [vmem:[#allocation4 + $0x17c] sm:$0xf]
    %v459 = vld [vmem:[#allocation4 + $0x180] sm:$0xf]
    %v460 = vld [vmem:[#allocation4 + $0x184] sm:$0xf]
    %v461 = vld [vmem:[#allocation4 + $0x188] sm:$0xf]
    %v462 = vld [vmem:[#allocation4 + $0x18c] sm:$0xf]
    %v463 = vld [vmem:[#allocation4 + $0x190] sm:$0xf]
    %v464 = vld [vmem:[#allocation4 + $0x194] sm:$0xf]
    %v465 = vld [vmem:[#allocation4 + $0x198] sm:$0xf]
    %v466 = vld [vmem:[#allocation4 + $0x19c] sm:$0xf]
    %v467 = vld [vmem:[#allocation4 + $0x1a0] sm:$0xf]
    %v468 = vld [vmem:[#allocation4 + $0x1a4] sm:$0xf]
    %v469 = vld [vmem:[#allocation4 + $0x1a8] sm:$0xf]
    %v470 = vld [vmem:[#allocation4 + $0x1ac] sm:$0xf]
    %v471 = vld [vmem:[#allocation4 + $0x1b0] sm:$0xf]
    %v472 = vld [vmem:[#allocation4 + $0x1b4] sm:$0xf]
    %v473 = vld [vmem:[#allocation4 + $0x1b8] sm:$0xf]
    %v474 = vld [vmem:[#allocation4 + $0x1bc] sm:$0xf]
    %v475 = vld [vmem:[%s4] sm:$0x1]
    %v477 = vlaneseq
    %v478 = vshrl.u32 %v477, 7
    %v479 = vsub.s32 0, %v478
    %v480 = vrot.slane %v475, %v479
    %v594 = vunpack.c.l.b16 %v363
    %v595 = vunpack.c.l.b16 %v364
    %v596 = vunpack.c.l.b16 %v365
    %v597 = vunpack.c.l.b16 %v366
    %v598 = vunpack.c.l.b16 %v367
    %v599 = vunpack.c.l.b16 %v368
    %v600 = vunpack.c.l.b16 %v369
    %v601 = vunpack.c.l.b16 %v370
    %v602 = vunpack.c.l.b16 %v371
    %v603 = vunpack.c.l.b16 %v372
    %v604 = vunpack.c.l.b16 %v373
    %v605 = vunpack.c.l.b16 %v374
    %v606 = vunpack.c.l.b16 %v375
    %v607 = vunpack.c.l.b16 %v376
    %v608 = vunpack.c.l.b16 %v377
    %v609 = vunpack.c.l.b16 %v378
    %v610 = vunpack.c.l.b16 %v379
    %v611 = vunpack.c.l.b16 %v380
    %v612 = vunpack.c.l.b16 %v381
    %v613 = vunpack.c.l.b16 %v382
    %v614 = vunpack.c.l.b16 %v383
    %v615 = vunpack.c.l.b16 %v384
    %v616 = vunpack.c.l.b16 %v385
    %v617 = vunpack.c.l.b16 %v386
    %v618 = vunpack.c.l.b16 %v387
    %v619 = vunpack.c.l.b16 %v388
    %v620 = vunpack.c.l.b16 %v389
    %v621 = vunpack.c.l.b16 %v390
    %v622 = vunpack.c.l.b16 %v391
    %v623 = vunpack.c.l.b16 %v392
    %v624 = vunpack.c.l.b16 %v393
    %v625 = vunpack.c.l.b16 %v394
    %v626 = vunpack.c.l.b16 %v395
    %v627 = vunpack.c.l.b16 %v396
    %v628 = vunpack.c.l.b16 %v397
    %v629 = vunpack.c.l.b16 %v398
    %v630 = vunpack.c.l.b16 %v399
    %v631 = vunpack.c.l.b16 %v400
    %v632 = vunpack.c.l.b16 %v401
    %v633 = vunpack.c.l.b16 %v402
    %v634 = vunpack.c.l.b16 %v403
    %v635 = vunpack.c.l.b16 %v404
    %v636 = vunpack.c.l.b16 %v405
    %v637 = vunpack.c.l.b16 %v406
    %v638 = vunpack.c.l.b16 %v407
    %v639 = vunpack.c.l.b16 %v408
    %v640 = vunpack.c.l.b16 %v409
    %v641 = vunpack.c.l.b16 %v410
    %v642 = vunpack.c.l.b16 %v411
    %v643 = vunpack.c.l.b16 %v412
    %v644 = vunpack.c.l.b16 %v413
    %v645 = vunpack.c.l.b16 %v414
    %v646 = vunpack.c.l.b16 %v415
    %v647 = vunpack.c.l.b16 %v416
    %v648 = vunpack.c.l.b16 %v417
    %v649 = vunpack.c.l.b16 %v418
    %v650 = vunpack.c.l.b16 %v419
    %v651 = vunpack.c.l.b16 %v420
    %v652 = vunpack.c.l.b16 %v421
    %v653 = vunpack.c.l.b16 %v422
    %v654 = vunpack.c.l.b16 %v423
    %v655 = vunpack.c.l.b16 %v424
    %v656 = vunpack.c.l.b16 %v425
    %v657 = vunpack.c.l.b16 %v426
    %v658 = vunpack.c.l.b16 %v427
    %v659 = vunpack.c.l.b16 %v428
    %v660 = vunpack.c.l.b16 %v429
    %v661 = vunpack.c.l.b16 %v430
    %v662 = vunpack.c.l.b16 %v431
    %v663 = vunpack.c.l.b16 %v432
    %v664 = vunpack.c.l.b16 %v433
    %v665 = vunpack.c.l.b16 %v434
    %v666 = vunpack.c.l.b16 %v435
    %v667 = vunpack.c.l.b16 %v436
    %v668 = vunpack.c.l.b16 %v437
    %v669 = vunpack.c.l.b16 %v438
    %v670 = vunpack.c.l.b16 %v439
    %v671 = vunpack.c.l.b16 %v440
    %v672 = vunpack.c.l.b16 %v441
    %v673 = vunpack.c.l.b16 %v442
    %v674 = vunpack.c.l.b16 %v443
    %v675 = vunpack.c.l.b16 %v444
    %v676 = vunpack.c.l.b16 %v445
    %v677 = vunpack.c.l.b16 %v446
    %v678 = vunpack.c.l.b16 %v447
    %v679 = vunpack.c.l.b16 %v448
    %v680 = vunpack.c.l.b16 %v449
    %v681 = vunpack.c.l.b16 %v450
    %v682 = vunpack.c.l.b16 %v451
    %v683 = vunpack.c.l.b16 %v452
    %v684 = vunpack.c.l.b16 %v453
    %v685 = vunpack.c.l.b16 %v454
    %v686 = vunpack.c.l.b16 %v455
    %v687 = vunpack.c.l.b16 %v456
    %v688 = vunpack.c.l.b16 %v457
    %v689 = vunpack.c.l.b16 %v458
    %v690 = vunpack.c.l.b16 %v459
    %v691 = vunpack.c.l.b16 %v460
    %v692 = vunpack.c.l.b16 %v461
    %v693 = vunpack.c.l.b16 %v462
    %v694 = vunpack.c.l.b16 %v463
    %v695 = vunpack.c.l.b16 %v464
    %v696 = vunpack.c.l.b16 %v465
    %v697 = vunpack.c.l.b16 %v466
    %v698 = vunpack.c.l.b16 %v467
    %v699 = vunpack.c.l.b16 %v468
    %v700 = vunpack.c.l.b16 %v469
    %v701 = vunpack.c.l.b16 %v470
    %v702 = vunpack.c.l.b16 %v471
    %v703 = vunpack.c.l.b16 %v472
    %v704 = vunpack.c.l.b16 %v473
    %v705 = vunpack.c.l.b16 %v474
    %v706 = vpack.c.b16 %v595, %v594
    %v707 = vpack.c.b16 %v597, %v596
    %v708 = vpack.c.b16 %v599, %v598
    %v709 = vpack.c.b16 %v601, %v600
    %v710 = vpack.c.b16 %v603, %v602
    %v711 = vpack.c.b16 %v605, %v604
    %v712 = vpack.c.b16 %v607, %v606
    %v713 = vpack.c.b16 %v609, %v608
    %v714 = vpack.c.b16 %v611, %v610
    %v715 = vpack.c.b16 %v613, %v612
    %v716 = vpack.c.b16 %v615, %v614
    %v717 = vpack.c.b16 %v617, %v616
    %v718 = vpack.c.b16 %v619, %v618
    %v719 = vpack.c.b16 %v621, %v620
    %v720 = vpack.c.b16 %v623, %v622
    %v721 = vpack.c.b16 %v625, %v624
    %v722 = vpack.c.b16 %v627, %v626
    %v723 = vpack.c.b16 %v629, %v628
    %v724 = vpack.c.b16 %v631, %v630
    %v725 = vpack.c.b16 %v633, %v632
    %v726 = vpack.c.b16 %v635, %v634
    %v727 = vpack.c.b16 %v637, %v636
    %v728 = vpack.c.b16 %v639, %v638
    %v729 = vpack.c.b16 %v641, %v640
    %v730 = vpack.c.b16 %v643, %v642
    %v731 = vpack.c.b16 %v645, %v644
    %v732 = vpack.c.b16 %v647, %v646
    %v733 = vpack.c.b16 %v649, %v648
    %v734 = vpack.c.b16 %v651, %v650
    %v735 = vpack.c.b16 %v653, %v652
    %v736 = vpack.c.b16 %v655, %v654
    %v737 = vpack.c.b16 %v657, %v656
    %v738 = vpack.c.b16 %v659, %v658
    %v739 = vpack.c.b16 %v661, %v660
    %v740 = vpack.c.b16 %v663, %v662
    %v741 = vpack.c.b16 %v665, %v664
    %v742 = vpack.c.b16 %v667, %v666
    %v743 = vpack.c.b16 %v669, %v668
    %v744 = vpack.c.b16 %v671, %v670
    %v745 = vpack.c.b16 %v673, %v672
    %v746 = vpack.c.b16 %v675, %v674
    %v747 = vpack.c.b16 %v677, %v676
    %v748 = vpack.c.b16 %v679, %v678
    %v749 = vpack.c.b16 %v681, %v680
    %v750 = vpack.c.b16 %v683, %v682
    %v751 = vpack.c.b16 %v685, %v684
    %v752 = vpack.c.b16 %v687, %v686
    %v753 = vpack.c.b16 %v689, %v688
    %v754 = vpack.c.b16 %v691, %v690
    %v755 = vpack.c.b16 %v693, %v692
    %v756 = vpack.c.b16 %v695, %v694
    %v757 = vpack.c.b16 %v697, %v696
    %v758 = vpack.c.b16 %v699, %v698
    %v759 = vpack.c.b16 %v701, %v700
    %v760 = vpack.c.b16 %v703, %v702
    %v761 = vpack.c.b16 %v705, %v704
    %818 = vmatprep.subr.bf16.mxu0 0
    %819 = vmatpush1.bf16.msra.mxu0 %v713
    %820 = vmatprep.subr.bf16.mxu0 0
    %821 = vmatpush1.bf16.msra.mxu0 %v712
    %822 = vmatprep.subr.bf16.mxu0 0
    %823 = vmatpush1.bf16.msra.mxu0 %v711
    %824 = vmatprep.subr.bf16.mxu0 0
    %825 = vmatpush1.bf16.msra.mxu0 %v710
    %826 = vmatprep.subr.bf16.mxu0 0
    %827 = vmatpush1.bf16.msra.mxu0 %v709
    %828 = vmatprep.subr.bf16.mxu0 0
    %829 = vmatpush1.bf16.msra.mxu0 %v708
    %830 = vmatprep.subr.bf16.mxu0 0
    %831 = vmatpush1.bf16.msra.mxu0 %v707
    %832 = vmatprep.subr.bf16.mxu0 0
    %833 = vmatpush1.bf16.msra.mxu0 %v706
    %834 = vmatprep.subr.bf16.mxu0 0
    %835 = vmatpush2.bf16.msra.mxu0 %v721
    %836 = vmatprep.subr.bf16.mxu0 0
    %837 = vmatpush2.bf16.msra.mxu0 %v720
    %838 = vmatprep.subr.bf16.mxu0 0
    %839 = vmatpush2.bf16.msra.mxu0 %v719
    %840 = vmatprep.subr.bf16.mxu0 0
    %841 = vmatpush2.bf16.msra.mxu0 %v718
    %842 = vmatprep.subr.bf16.mxu0 0
    %843 = vmatpush2.bf16.msra.mxu0 %v717
    %844 = vmatprep.subr.bf16.mxu0 0
    %845 = vmatpush2.bf16.msra.mxu0 %v716
    %846 = vmatprep.subr.bf16.mxu0 0
    %847 = vmatpush2.bf16.msra.mxu0 %v715
    %848 = vmatprep.subr.bf16.mxu0 0
    %849 = vmatpush2.bf16.msra.mxu0 %v714
    %850 = vmatprep.mubr.bf16.mxu0 %v357
    %851 = vmatmul.mubr.bf16.gmra.mxu0 %v356
    %v852 = vpop.f32.mrf.mxu0
    %v853 = vadd.f32 %v480, %v852
    %v854 = vpop.f32.mrf.mxu0
    %v855 = vpop.f32.mrf.mxu0
    %v856 = vpop.f32.mrf.mxu0
    %857 = vdwg.mxu0
    %858 = vmatprep.subr.bf16.mxu0 0
    %859 = vmatpush1.bf16.msra.mxu0 %v729
    %860 = vmatprep.subr.bf16.mxu0 0
    %861 = vmatpush1.bf16.msra.mxu0 %v728
    %862 = vmatprep.subr.bf16.mxu0 0
    %863 = vmatpush1.bf16.msra.mxu0 %v727
    %864 = vmatprep.subr.bf16.mxu0 0
    %865 = vmatpush1.bf16.msra.mxu0 %v726
    %866 = vmatprep.subr.bf16.mxu0 0
    %867 = vmatpush1.bf16.msra.mxu0 %v725
    %868 = vmatprep.subr.bf16.mxu0 0
    %869 = vmatpush1.bf16.msra.mxu0 %v724
    %870 = vmatprep.subr.bf16.mxu0 0
    %871 = vmatpush1.bf16.msra.mxu0 %v723
    %872 = vmatprep.subr.bf16.mxu0 0
    %873 = vmatpush1.bf16.msra.mxu0 %v722
    %874 = vmatprep.subr.bf16.mxu0 0
    %875 = vmatpush2.bf16.msra.mxu0 %v737
    %876 = vmatprep.subr.bf16.mxu0 0
    %877 = vmatpush2.bf16.msra.mxu0 %v736
    %878 = vmatprep.subr.bf16.mxu0 0
    %879 = vmatpush2.bf16.msra.mxu0 %v735
    %880 = vmatprep.subr.bf16.mxu0 0
    %881 = vmatpush2.bf16.msra.mxu0 %v734
    %882 = vmatprep.subr.bf16.mxu0 0
    %883 = vmatpush2.bf16.msra.mxu0 %v733
    %884 = vmatprep.subr.bf16.mxu0 0
    %885 = vmatpush2.bf16.msra.mxu0 %v732
    %886 = vmatprep.subr.bf16.mxu0 0
    %887 = vmatpush2.bf16.msra.mxu0 %v731
    %888 = vmatprep.subr.bf16.mxu0 0
    %889 = vmatpush2.bf16.msra.mxu0 %v730
    %890 = vmatprep.mubr.bf16.mxu0 %v359
    %891 = vmatmul.mubr.bf16.gmra.mxu0 %v358
    %v892 = vpop.f32.mrf.mxu0
    %v893 = vadd.f32 %v853, %v892
    %v894 = vpop.f32.mrf.mxu0
    %v895 = vpop.f32.mrf.mxu0
    %v896 = vpop.f32.mrf.mxu0
    %897 = vdwg.mxu0
    %898 = vmatprep.subr.bf16.mxu0 0
    %899 = vmatpush1.bf16.msra.mxu0 %v745
    %900 = vmatprep.subr.bf16.mxu0 0
    %901 = vmatpush1.bf16.msra.mxu0 %v744
    %902 = vmatprep.subr.bf16.mxu0 0
    %903 = vmatpush1.bf16.msra.mxu0 %v743
    %904 = vmatprep.subr.bf16.mxu0 0
    %905 = vmatpush1.bf16.msra.mxu0 %v742
    %906 = vmatprep.subr.bf16.mxu0 0
    %907 = vmatpush1.bf16.msra.mxu0 %v741
    %908 = vmatprep.subr.bf16.mxu0 0
    %909 = vmatpush1.bf16.msra.mxu0 %v740
    %910 = vmatprep.subr.bf16.mxu0 0
    %911 = vmatpush1.bf16.msra.mxu0 %v739
    %912 = vmatprep.subr.bf16.mxu0 0
    %913 = vmatpush1.bf16.msra.mxu0 %v738
    %914 = vmatprep.subr.bf16.mxu0 0
    %915 = vmatpush2.bf16.msra.mxu0 %v753
    %916 = vmatprep.subr.bf16.mxu0 0
    %917 = vmatpush2.bf16.msra.mxu0 %v752
    %918 = vmatprep.subr.bf16.mxu0 0
    %919 = vmatpush2.bf16.msra.mxu0 %v751
    %920 = vmatprep.subr.bf16.mxu0 0
    %921 = vmatpush2.bf16.msra.mxu0 %v750
    %922 = vmatprep.subr.bf16.mxu0 0
    %923 = vmatpush2.bf16.msra.mxu0 %v749
    %924 = vmatprep.subr.bf16.mxu0 0
    %925 = vmatpush2.bf16.msra.mxu0 %v748
    %926 = vmatprep.subr.bf16.mxu0 0
    %927 = vmatpush2.bf16.msra.mxu0 %v747
    %928 = vmatprep.subr.bf16.mxu0 0
    %929 = vmatpush2.bf16.msra.mxu0 %v746
    %930 = vmatprep.mubr.bf16.mxu0 %v361
    %931 = vmatmul.mubr.bf16.gmra.mxu0 %v360
    %v932 = vpop.f32.mrf.mxu0
    %v933 = vadd.f32 %v893, %v932
    %v934 = vpop.f32.mrf.mxu0
    %v935 = vpop.f32.mrf.mxu0
    %v936 = vpop.f32.mrf.mxu0
    %937 = vdwg.mxu0
    %938 = vmatprep.subr.bf16.mxu0 0
    %939 = vmatpush1.bf16.msra.mxu0 %v761
    %940 = vmatprep.subr.bf16.mxu0 0
    %941 = vmatpush1.bf16.msra.mxu0 %v760
    %942 = vmatprep.subr.bf16.mxu0 0
    %943 = vmatpush1.bf16.msra.mxu0 %v759
    %944 = vmatprep.subr.bf16.mxu0 0
    %945 = vmatpush1.bf16.msra.mxu0 %v758
    %946 = vmatprep.subr.bf16.mxu0 0
    %947 = vmatpush1.bf16.msra.mxu0 %v757
    %948 = vmatprep.subr.bf16.mxu0 0
    %949 = vmatpush1.bf16.msra.mxu0 %v756
    %950 = vmatprep.subr.bf16.mxu0 0
    %951 = vmatpush1.bf16.msra.mxu0 %v755
    %952 = vmatprep.subr.bf16.mxu0 0
    %953 = vmatpush1.bf16.msra.mxu0 %v754
    %954 = vmatprep.subr.bf16.mxu0 0
    %955 = vmatpush2.bf16.msra.mxu0 0
    %956 = vmatprep.subr.bf16.mxu0 0
    %957 = vmatpush2.bf16.msra.mxu0 0
    %958 = vmatprep.subr.bf16.mxu0 0
    %959 = vmatpush2.bf16.msra.mxu0 0
    %960 = vmatprep.subr.bf16.mxu0 0
    %961 = vmatpush2.bf16.msra.mxu0 0
    %962 = vmatprep.subr.bf16.mxu0 0
    %963 = vmatpush2.bf16.msra.mxu0 0
    %964 = vmatprep.subr.bf16.mxu0 0
    %965 = vmatpush2.bf16.msra.mxu0 0
    %966 = vmatprep.subr.bf16.mxu0 0
    %967 = vmatpush2.bf16.msra.mxu0 0
    %968 = vmatprep.subr.bf16.mxu0 0
    %969 = vmatpush2.bf16.msra.mxu0 0
    %970 = vmatprep.mubr.bf16.mxu0 0
    %971 = vmatmul.mubr.bf16.gmra.mxu0 %v362
    %v972 = vpop.f32.mrf.mxu0
    %v973 = vadd.f32 %v933, %v972
    %v974 = vpop.f32.mrf.mxu0
    %v975 = vpop.f32.mrf.mxu0
    %v976 = vpop.f32.mrf.mxu0
    %977 = vdwg.mxu0
    %v978 = vmax.f32 %v973, 0.0
    %v979 = vpack.c.bf16 %v978, %v978
    %v980 = vld [vmem:[%s5] sm:$0xf]
    %v981 = vld [vmem:[%s5 + $0x4] sm:$0xf]
    %v982 = vld [vmem:[%s5 + $0x8] sm:$0xf]
    %v983 = vld [vmem:[%s5 + $0xc] sm:$0xf]
    %v984 = vld [vmem:[%s5 + $0x10] sm:$0xf]
    %v985 = vld [vmem:[%s5 + $0x14] sm:$0xf]
    %v986 = vld [vmem:[%s5 + $0x18] sm:$0xf]
    %v987 = vld [vmem:[%s5 + $0x1c] sm:$0xf]
    %v988 = vld [vmem:[%s5 + $0x20] sm:$0xf]
    %v989 = vld [vmem:[%s5 + $0x24] sm:$0xf]
    %v990 = vld [vmem:[%s5 + $0x28] sm:$0xf]
    %v991 = vld [vmem:[%s5 + $0x2c] sm:$0xf]
    %v992 = vld [vmem:[%s5 + $0x30] sm:$0xf]
    %v993 = vld [vmem:[%s5 + $0x34] sm:$0xf]
    %v994 = vld [vmem:[%s5 + $0x38] sm:$0xf]
    %v995 = vld [vmem:[%s5 + $0x3c] sm:$0xf]
    %v996 = vld [vmem:[%s6] sm:$0x1]
    %v998 = vlaneseq
    %v999 = vshrl.u32 %v998, 7
    %v1000 = vsub.s32 0, %v999
    %v1001 = vrot.slane %v996, %v1000
    %v1019 = vunpack.c.l.b16 %v980
    %v1020 = vunpack.c.l.b16 %v981
    %v1021 = vunpack.c.l.b16 %v982
    %v1022 = vunpack.c.l.b16 %v983
    %v1023 = vunpack.c.l.b16 %v984
    %v1024 = vunpack.c.l.b16 %v985
    %v1025 = vunpack.c.l.b16 %v986
    %v1026 = vunpack.c.l.b16 %v987
    %v1027 = vunpack.c.l.b16 %v988
    %v1028 = vunpack.c.l.b16 %v989
    %v1029 = vunpack.c.l.b16 %v990
    %v1030 = vunpack.c.l.b16 %v991
    %v1031 = vunpack.c.l.b16 %v992
    %v1032 = vunpack.c.l.b16 %v993
    %v1033 = vunpack.c.l.b16 %v994
    %v1034 = vunpack.c.l.b16 %v995
    %v1035 = vpack.c.b16 %v1020, %v1019
    %v1036 = vpack.c.b16 %v1022, %v1021
    %v1037 = vpack.c.b16 %v1024, %v1023
    %v1038 = vpack.c.b16 %v1026, %v1025
    %v1039 = vpack.c.b16 %v1028, %v1027
    %v1040 = vpack.c.b16 %v1030, %v1029
    %v1041 = vpack.c.b16 %v1032, %v1031
    %v1042 = vpack.c.b16 %v1034, %v1033
    %1051 = vmatprep.subr.bf16.mxu0 0
    %1052 = vmatpush1.bf16.msra.mxu0 %v1042
    %1053 = vmatprep.subr.bf16.mxu0 0
    %1054 = vmatpush1.bf16.msra.mxu0 %v1041
    %1055 = vmatprep.subr.bf16.mxu0 0
    %1056 = vmatpush1.bf16.msra.mxu0 %v1040
    %1057 = vmatprep.subr.bf16.mxu0 0
    %1058 = vmatpush1.bf16.msra.mxu0 %v1039
    %1059 = vmatprep.subr.bf16.mxu0 0
    %1060 = vmatpush1.bf16.msra.mxu0 %v1038
    %1061 = vmatprep.subr.bf16.mxu0 0
    %1062 = vmatpush1.bf16.msra.mxu0 %v1037
    %1063 = vmatprep.subr.bf16.mxu0 0
    %1064 = vmatpush1.bf16.msra.mxu0 %v1036
    %1065 = vmatprep.subr.bf16.mxu0 0
    %1066 = vmatpush1.bf16.msra.mxu0 %v1035
    %1067 = vmatprep.subr.bf16.mxu0 0
    %1068 = vmatpush2.bf16.msra.mxu0 0
    %1069 = vmatprep.subr.bf16.mxu0 0
    %1070 = vmatpush2.bf16.msra.mxu0 0
    %1071 = vmatprep.subr.bf16.mxu0 0
    %1072 = vmatpush2.bf16.msra.mxu0 0
    %1073 = vmatprep.subr.bf16.mxu0 0
    %1074 = vmatpush2.bf16.msra.mxu0 0
    %1075 = vmatprep.subr.bf16.mxu0 0
    %1076 = vmatpush2.bf16.msra.mxu0 0
    %1077 = vmatprep.subr.bf16.mxu0 0
    %1078 = vmatpush2.bf16.msra.mxu0 0
    %1079 = vmatprep.subr.bf16.mxu0 0
    %1080 = vmatpush2.bf16.msra.mxu0 0
    %1081 = vmatprep.subr.bf16.mxu0 0
    %1082 = vmatpush2.bf16.msra.mxu0 0
    %1083 = vmatprep.mubr.bf16.mxu0 0
    %1084 = vmatmul.mubr.bf16.gmra.mxu0 %v979
    %v1085 = vpop.f32.mrf.mxu0
    %v1086 = vadd.f32 %v1001, %v1085
    %v1087 = vpop.f32.mrf.mxu0
    %v1088 = vpop.f32.mrf.mxu0
    %v1089 = vpop.f32.mrf.mxu0
    %1090 = vdwg.mxu0
    %vm1091 = vcmask 58368
    %v1092 = vsel %vm1091, %v1086, -inf
    %1093 = vmax.xlane.f32.xlu0 %v1092
    %v1094 = vpop.xlane.xlu0 %1093
    %v1095 = vsub.f32 %v1086, %v1094
    %v1096 = vmul.f32 %v1095, 1.442695
    %v1097 = vpow.pop %v1096
    %v1098 = vsel %vm1091, %v1097, 0.0
    %1099 = vadd.xlane.f32.xlu0 %v1098
    %v1100 = vpop.xlane.xlu0 %1099
    %v1101 = vrcp.pop %v1100
    %v1102 = vmul.f32 %v1097, %v1101
    %vm1103 = vcmask 123968
    %v1104 = vsel %vm1103, %v1086, -inf
    %1105 = vmax.xlane.f32.xlu0 %v1104
    %v1106 = vpop.xlane.xlu0 %1105
    %v1107 = vsub.f32 %v1086, %v1106
    %v1108 = vmul.f32 %v1107, 1.442695
    %v1109 = vpow.pop %v1108
    %1111 = vrot.lane.b32.xlu0 %v1109, 120
    %v1112 = vpop.permute.xlu0 %1111
    %v1114 = vsel %vm1091, %v1112, 0.0
    %1115 = vadd.xlane.f32.xlu0 %v1114
    %v1116 = vpop.xlane.xlu0 %1115
    %v1117 = vrcp.pop %v1116
    %v1118 = vmul.f32 %v1109, %v1117
    %vm1119 = vcmask 189568
    %v1120 = vsel %vm1119, %v1086, -inf
    %1121 = vmax.xlane.f32.xlu0 %v1120
    %v1122 = vpop.xlane.xlu0 %1121
    %v1123 = vsub.f32 %v1086, %v1122
    %v1124 = vmul.f32 %v1123, 1.442695
    %v1125 = vpow.pop %v1124
    %1127 = vrot.lane.b32.xlu0 %v1125, 112
    %v1128 = vpop.permute.xlu0 %1127
    %v1130 = vsel %vm1091, %v1128, 0.0
    %1131 = vadd.xlane.f32.xlu0 %v1130
    %v1132 = vpop.xlane.xlu0 %1131
    %v1133 = vrcp.pop %v1132
    %v1134 = vmul.f32 %v1125, %v1133
    %vm1135 = vcmask 64512
    %v1136 = vsel %vm1135, %v1102, %v1118
    %vm1137 = vcmask 130048
    %v1138 = vsel %vm1137, %v1136, %v1134
    %vm1139 = vcmask 189440
    %1140 = vst.msk [vmem:[%s7] sm:$0x3] %vm1139, %v1138
    // Predicated region
    $region38: #{actor_forward.1} parent=1 // pred_check
      _
    $region39: #{actor_forward.1} parent=1 // pred_check_branch
      %1142 = sbr.rel (0) target = $region41
    $region40: #{actor_forward.1} parent=1 // pred_region
      _
    $region41: #{actor_forward.1} parent=1 // pred_fallthru
      _
    // Predicated region
    $region42: #{actor_forward.1} parent=1 // pred_check
      _
    $region43: #{actor_forward.1} parent=1 // pred_check_branch
      %1144 = sbr.rel (0) target = $region45
    $region44: #{actor_forward.1} parent=1 // pred_region
      _
    $region45: #{actor_forward.1} parent=1 // pred_fallthru
      _
    %1145 = vsyncpa [#allocation3], 1
    %1146 = vsyncpa [#allocation5], 1

</llo_original>
